<compile_context>
chip_gen: v5e
topology: v5e:2x2
jax: 0.10.0
libtpu: 0.0.40
codegen_flags: <defaults>
</compile_context>

<pallas_src>
import functools

import jax
import jax.numpy as jnp
from jax.experimental import pallas as pl
from jax.experimental.pallas import tpu as pltpu


def _round_up(n, m):
    return ((n + m - 1) // m) * m


def _pick_tile(n, target, align):
    """Largest multiple of `align` that divides n and is <= target; full extent if none."""
    if n <= target:
        return n
    t = (target // align) * align
    while t >= align:
        if n % t == 0:
            return t
        t -= align
    return n


def _vmem_budget_bytes():
    """Physical VMEM capacity minus headroom for compiler-internal scratch (chip-aware)."""
    try:
        info = pltpu.get_tpu_info()
        cap = int(getattr(info, "vmem_capacity_bytes", 64 << 20))
    except Exception:
        cap = 64 << 20                      # conservative (v7x-sized) fallback
    return max(24 << 20, cap - (16 << 20))  # leave ~16 MiB headroom


def _ffn_kernel(x_ref, nw_ref, wgu_ref, wd_ref, o_ref, xn_ref, acc_ref, *, eps, t_inter):
    ii = pl.program_id(1)
    n_ii = pl.num_programs(1)

    # ---- per-token-tile prologue: RMSNorm (f32 math, cast back like the torch module) ----
    @pl.when(ii == 0)
    def _():
        x = x_ref[...].astype(jnp.float32)                         # (tT, H)
        var = jnp.mean(x * x, axis=-1, keepdims=True)              # (tT, 1)
        xn = x * jax.lax.rsqrt(var + eps)
        xn_ref[...] = (nw_ref[...].astype(jnp.float32) * xn).astype(xn_ref.dtype)

    xn = xn_ref[...]                                               # (tT, H), input dtype

    # ---- fused gate/up projection: one MXU pass with a 2*tI-wide RHS (f32 accumulation) ----
    gu = jnp.dot(xn, wgu_ref[...], preferred_element_type=jnp.float32)   # (tT, 2*tI)
    gate = gu[:, :t_inter]
    up = gu[:, t_inter:]
    h = (gate * jax.nn.sigmoid(gate) * up).astype(wd_ref.dtype)         # SiLU(gate) * up

    # ---- partial down projection for this intermediate tile ----
    part = jnp.dot(h, wd_ref[...], preferred_element_type=jnp.float32)  # (tT, H)

    # First partial stored directly (avoids a full tT x H zero-store + read-add pass).
    @pl.when(ii == 0)
    def _():
        acc_ref[...] = part

    @pl.when(ii != 0)
    def _():
        acc_ref[...] += part

    # ---- per-token-tile epilogue: write the full-H, lane-dense output block ----
    @pl.when(ii == n_ii - 1)
    def _():
        o_ref[...] = acc_ref[...].astype(o_ref.dtype)


def llama4_ffn_pallas(x, norm_weight, w_gate, w_up, w_down, *, eps,
                      token_tile_target=512, inter_tile_target=256):
    """x: (T, H); w_gate/w_up: (H, I) [in,out]; w_down: (I, H) [in,out]; norm_weight: (H,) or (1,H)."""
    T, H = x.shape
    I = w_gate.shape[1]
    norm_weight = norm_weight.reshape(1, H)

    x_is = jnp.dtype(x.dtype).itemsize
    w_is = jnp.dtype(w_gate.dtype).itemsize
    # Token-tile alignment: 8 sublanes for f32, 16 for bf16 (packed sublanes), 32 for int8.
    tok_align = max(8, 32 // max(1, x_is))

    budget = _vmem_budget_bytes()

    # Initial tile choice: large token tile (arithmetic intensity ~ tT FLOP/byte vs streamed
    # weights), moderate intermediate tile (keeps the double-buffered weight footprint flat).
    tT = _round_up(min(token_tile_target, _round_up(T, tok_align)), tok_align)
    tI = _pick_tile(I, inter_tile_target, 128)

    def est(tt, ti):
        return (
            2 * tt * H * x_is               # x token block (double-buffered)
            + 2 * H * w_is                  # norm weight
            + 2 * H * (2 * ti) * w_is       # fused gate/up weight block (double-buffered)
            + 2 * ti * H * w_is             # down weight block (double-buffered)
            + 2 * tt * H * x_is             # output block (double-buffered)
            + tt * H * x_is                 # xn scratch
            + tt * H * 4                    # f32 accumulator
            + 3 * tt * ti * 4               # gu / h f32 live intermediates (rough)
        )

    # Shrink tI first, then tT, until the footprint fits the chip's VMEM budget.
    for _ in range(16):
        if est(tT, tI) <= budget:
            break
        if tI > 128:
            new_tI = _pick_tile(I, tI // 2, 128)
            if new_tI < tI:
                tI = new_tI
                continue
        if tT > tok_align:
            tT = max(tok_align, _round_up(tT // 2, tok_align))
            continue
        break

    # Pad ragged token counts so the grid divides evenly (padded rows are zeros; sliced off).
    T_pad = _round_up(T, tT)
    if T_pad != T:
        x = jnp.pad(x, ((0, T_pad - T), (0, 0)))

    n_inter = I // tI
    grid = (T_pad // tT, n_inter)

    # Fuse gate/up at block granularity and pre-block so each streamed block is one contiguous
    # DMA: wgu[b] = concat(w_gate[:, b*tI:(b+1)*tI], w_up[:, b*tI:(b+1)*tI], axis=-1).
    wgu = jnp.concatenate(
        [w_gate.reshape(H, n_inter, tI), w_up.reshape(H, n_inter, tI)], axis=-1
    ).transpose(1, 0, 2)                                  # (n_inter, H, 2*tI), block-contiguous
    # w_down's (tI, H) row blocks are already contiguous; no re-layout needed.

    vmem_limit = int(min(budget, max(32 << 20, int(1.5 * est(tT, tI)))))

    out = pl.pallas_call(
        functools.partial(_ffn_kernel, eps=eps, t_inter=tI),
        out_shape=jax.ShapeDtypeStruct((T_pad, H), x.dtype),
        grid_spec=pltpu.PrefetchScalarGridSpec(
            num_scalar_prefetch=0,
            grid=grid,
            in_specs=[
                # x token tile: constant along the intermediate axis -> stays resident.
                pl.BlockSpec((tT, H), lambda ti, ii: (ti, 0)),
                # RMSNorm weight: tiny, constant.
                pl.BlockSpec((1, H), lambda ti, ii: (0, 0)),
                # Fused gate/up weights: one contiguous (H, 2*tI) block per inner step.
                pl.BlockSpec((None, H, 2 * tI), lambda ti, ii: (ii, 0, 0)),
                # Down weights: (tI, H) row blocks along the intermediate axis.
                pl.BlockSpec((tI, H), lambda ti, ii: (ii, 0)),
            ],
            # Output block index constant along the intermediate axis -> resident accumulator.
            out_specs=pl.BlockSpec((tT, H), lambda ti, ii: (ti, 0)),
            scratch_shapes=[
                pltpu.VMEM((tT, H), x.dtype),      # normalized activations (reused across ii)
                pltpu.VMEM((tT, H), jnp.float32),  # f32 down-projection accumulator
            ],
        ),
        compiler_params=pltpu.CompilerParams(
            dimension_semantics=("parallel", "arbitrary"),
            vmem_limit_bytes=vmem_limit,
        ),
    )(x, norm_weight, wgu, w_down)

    return out[:T] if T_pad != T else out


def llama4_ffn_reference(x, norm_weight, w_gate, w_up, w_down, *, eps):
    xf = x.astype(jnp.float32)
    var = jnp.mean(xf * xf, axis=-1, keepdims=True)
    xn = (norm_weight.reshape(1, -1).astype(jnp.float32)
          * (xf * jax.lax.rsqrt(var + eps))).astype(x.dtype)
    gate = xn @ w_gate
    up = xn @ w_up
    return (jax.nn.silu(gate) * up) @ w_down


if __name__ == "__main__":
    # config (ffn_bias=False, hidden_act='silu')
    config = dict(hidden_size=32, intermediate_size=64, hidden_act="silu",
                  ffn_bias=False, rms_norm_eps=1e-6)
    batch, seq = 2, 8
    H, I = config["hidden_size"], config["intermediate_size"]
    eps = config["rms_norm_eps"]

    key = jax.random.PRNGKey(0)
    kx, kg, ku, kd = jax.random.split(key, 4)

    hidden_states = jax.random.normal(kx, (batch, seq, H), dtype=jnp.float32)

    # Deterministic parameter init (module's RMSNorm weight is ones; Linears have no bias).
    norm_weight = jnp.ones((H,), dtype=jnp.float32)
    w_gate = jax.random.normal(kg, (H, I), dtype=jnp.float32) * 0.05   # [in, out]
    w_up = jax.random.normal(ku, (H, I), dtype=jnp.float32) * 0.05     # [in, out]
    w_down = jax.random.normal(kd, (I, H), dtype=jnp.float32) * 0.05   # [in, out]

    x2d = hidden_states.reshape(batch * seq, H)   # flatten tokens
    out2d = llama4_ffn_pallas(x2d, norm_weight, w_gate, w_up, w_down, eps=eps)
    out = out2d.reshape(batch, seq, H)
    jax.block_until_ready(out)

    ref = llama4_ffn_reference(x2d, norm_weight, w_gate, w_up, w_down,
                               eps=eps).reshape(batch, seq, H)
    assert jnp.allclose(out, ref, atol=1e-4, rtol=1e-4), "mismatch vs reference"

    print("KERNEL_OK")
</pallas_src>

<mosaic_0001>
module attributes {stable_mosaic.version = 11 : i64} {
  func.func @_ffn_kernel(%arg0: i32, %arg1: i32, %arg2: memref<16x32xf32, #tpu.memory_space<vmem>>, %arg3: memref<1x32xf32, #tpu.memory_space<vmem>>, %arg4: memref<1x32x128xf32, #tpu.memory_space<vmem>>, %arg5: memref<64x32xf32, #tpu.memory_space<vmem>>, %arg6: memref<16x32xf32, #tpu.memory_space<vmem>>, %arg7: memref<16x32xf32, #tpu.memory_space<vmem>>, %arg8: memref<16x32xf32, #tpu.memory_space<vmem>>) attributes {dimension_semantics = [#tpu.dimension_semantics<parallel>, #tpu.dimension_semantics<arbitrary>], iteration_bounds = array<i64: 1, 1>, scalar_prefetch = 0 : i64, scratch_operands = 2 : i64, tpu.core_type = #tpu.core_type<tc>, window_params = [{transform_indices = @transform_0, window_bounds = array<i64: 16, 32>}, {pipeline_mode = #tpu.pipeline_mode<synchronous>, transform_indices = @transform_1, window_bounds = array<i64: 1, 32>}, {transform_indices = @transform_2, window_bounds = array<i64: 1, 32, 128>}, {transform_indices = @transform_3, window_bounds = array<i64: 64, 32>}, {transform_indices = @transform_4, window_bounds = array<i64: 16, 32>}]} {
    %c0_i32 = arith.constant 0 : i32
    %0 = arith.cmpi eq, %arg1, %c0_i32 : i32
    %1 = arith.extui %0 : i1 to i32
    %c0_i32_0 = arith.constant 0 : i32
    %2 = arith.cmpi ne, %1, %c0_i32_0 : i32
    scf.if %2 {
      %c0_15 = arith.constant 0 : index
      %c0_16 = arith.constant 0 : index
      %27 = vector.load %arg2[%c0_15, %c0_16] : memref<16x32xf32, #tpu.memory_space<vmem>>, vector<16x32xf32>
      %28 = arith.mulf %27, %27 : vector<16x32xf32>
      %cst_17 = arith.constant dense<0.000000e+00> : vector<16xf32>
      %29 = vector.multi_reduction <add>, %28, %cst_17 [1] : vector<16x32xf32> to vector<16xf32>
      %30 = vector.shape_cast %29 : vector<16xf32> to vector<16x1xf32>
      %cst_18 = arith.constant 3.200000e+01 : f32
      %31 = vector.broadcast %cst_18 : f32 to vector<16x1xf32>
      %32 = arith.divf %30, %31 : vector<16x1xf32>
      %cst_19 = arith.constant 9.99999997E-7 : f32
      %33 = vector.broadcast %cst_19 : f32 to vector<16x1xf32>
      %34 = arith.addf %32, %33 : vector<16x1xf32>
      %35 = math.rsqrt %34 : vector<16x1xf32>
      %36 = vector.broadcast %35 : vector<16x1xf32> to vector<16x32xf32>
      %37 = arith.mulf %27, %36 : vector<16x32xf32>
      %c0_20 = arith.constant 0 : index
      %c0_21 = arith.constant 0 : index
      %38 = vector.load %arg3[%c0_20, %c0_21] : memref<1x32xf32, #tpu.memory_space<vmem>>, vector<1x32xf32>
      %39 = vector.broadcast %38 : vector<1x32xf32> to vector<16x32xf32>
      %40 = arith.mulf %39, %37 : vector<16x32xf32>
      %c0_22 = arith.constant 0 : index
      %c0_23 = arith.constant 0 : index
      %41 = vector.load %arg7[%c0_22, %c0_23] : memref<16x32xf32, #tpu.memory_space<vmem>>, vector<16x32xf32>
      tpu.vector_store %arg7[%c0_22, %c0_23], %40 {strides = array<i32>} : memref<16x32xf32, #tpu.memory_space<vmem>>, vector<16x32xf32>,
    } else {
    }
    %c0 = arith.constant 0 : index
    %c0_1 = arith.constant 0 : index
    %3 = vector.load %arg7[%c0, %c0_1] : memref<16x32xf32, #tpu.memory_space<vmem>>, vector<16x32xf32>
    %c0_2 = arith.constant 0 : index
    %c0_3 = arith.constant 0 : index
    %c0_4 = arith.constant 0 : index
    %4 = vector.load %arg4[%c0_2, %c0_3, %c0_4] : memref<1x32x128xf32, #tpu.memory_space<vmem>>, vector<1x32x128xf32>
    %5 = vector.shape_cast %4 : vector<1x32x128xf32> to vector<32x128xf32>
    %cst = arith.constant dense<0.000000e+00> : vector<16x128xf32>
    %6 = tpu.matmul %3, %5, %cst {dimension_numbers = #tpu.dot_dimension_numbers<[1], [0], [0], [1], [0, 0, 1, 1], [], []>} : vector<16x32xf32>, vector<32x128xf32>, vector<16x128xf32> -> vector<16x128xf32>
    %7 = vector.extract_strided_slice %6 {offsets = [0, 0], sizes = [16, 64], strides = [1, 1]} : vector<16x128xf32> to vector<16x64xf32>
    %8 = vector.extract_strided_slice %6 {offsets = [0, 64], sizes = [16, 64], strides = [1, 1]} : vector<16x128xf32> to vector<16x64xf32>
    %9 = arith.negf %7 : vector<16x64xf32>
    %10 = math.exp %9 : vector<16x64xf32>
    %cst_5 = arith.constant 1.000000e+00 : f32
    %11 = vector.broadcast %cst_5 : f32 to vector<16x64xf32>
    %12 = arith.addf %11, %10 : vector<16x64xf32>
    %13 = arith.divf %11, %12 : vector<16x64xf32>
    %14 = arith.mulf %7, %13 : vector<16x64xf32>
    %15 = arith.mulf %14, %8 : vector<16x64xf32>
    %c0_6 = arith.constant 0 : index
    %c0_7 = arith.constant 0 : index
    %16 = vector.load %arg5[%c0_6, %c0_7] : memref<64x32xf32, #tpu.memory_space<vmem>>, vector<64x32xf32>
    %cst_8 = arith.constant dense<0.000000e+00> : vector<16x32xf32>
    %17 = tpu.matmul %15, %16, %cst_8 {dimension_numbers = #tpu.dot_dimension_numbers<[1], [0], [0], [1], [0, 0, 1, 1], [], []>} : vector<16x64xf32>, vector<64x32xf32>, vector<16x32xf32> -> vector<16x32xf32>
    %c0_i32_9 = arith.constant 0 : i32
    %18 = arith.cmpi eq, %arg1, %c0_i32_9 : i32
    %19 = arith.extui %18 : i1 to i32
    %c0_i32_10 = arith.constant 0 : i32
    %20 = arith.cmpi ne, %19, %c0_i32_10 : i32
    scf.if %20 {
      %c0_15 = arith.constant 0 : index
      %c0_16 = arith.constant 0 : index
      %27 = vector.load %arg8[%c0_15, %c0_16] : memref<16x32xf32, #tpu.memory_space<vmem>>, vector<16x32xf32>
      tpu.vector_store %arg8[%c0_15, %c0_16], %17 {strides = array<i32>} : memref<16x32xf32, #tpu.memory_space<vmem>>, vector<16x32xf32>,
    } else {
    }
    %c0_i32_11 = arith.constant 0 : i32
    %21 = arith.cmpi ne, %arg1, %c0_i32_11 : i32
    %22 = arith.extui %21 : i1 to i32
    %c0_i32_12 = arith.constant 0 : i32
    %23 = arith.cmpi ne, %22, %c0_i32_12 : i32
    scf.if %23 {
      %c0_15 = arith.constant 0 : index
      %c0_16 = arith.constant 0 : index
      %27 = vector.load %arg8[%c0_15, %c0_16] : memref<16x32xf32, #tpu.memory_space<vmem>>, vector<16x32xf32>
      %28 = arith.addf %27, %17 : vector<16x32xf32>
      %c0_17 = arith.constant 0 : index
      %c0_18 = arith.constant 0 : index
      %29 = vector.load %arg8[%c0_17, %c0_18] : memref<16x32xf32, #tpu.memory_space<vmem>>, vector<16x32xf32>
      tpu.vector_store %arg8[%c0_17, %c0_18], %28 {strides = array<i32>} : memref<16x32xf32, #tpu.memory_space<vmem>>, vector<16x32xf32>,
    } else {
    }
    %c0_i32_13 = arith.constant 0 : i32
    %24 = arith.cmpi eq, %arg1, %c0_i32_13 : i32
    %25 = arith.extui %24 : i1 to i32
    %c0_i32_14 = arith.constant 0 : i32
    %26 = arith.cmpi ne, %25, %c0_i32_14 : i32
    scf.if %26 {
      %c0_15 = arith.constant 0 : index
      %c0_16 = arith.constant 0 : index
      %27 = vector.load %arg8[%c0_15, %c0_16] : memref<16x32xf32, #tpu.memory_space<vmem>>, vector<16x32xf32>
      %c0_17 = arith.constant 0 : index
      %c0_18 = arith.constant 0 : index
      %28 = vector.load %arg6[%c0_17, %c0_18] : memref<16x32xf32, #tpu.memory_space<vmem>>, vector<16x32xf32>
      tpu.vector_store %arg6[%c0_17, %c0_18], %27 {strides = array<i32>} : memref<16x32xf32, #tpu.memory_space<vmem>>, vector<16x32xf32>,
    } else {
    }
    return
  }
  func.func @transform_0(%arg0: i32, %arg1: i32) -> (i32, i32) {
    %c0_i32 = arith.constant 0 : i32
    %c0_i32_0 = arith.constant 0 : i32
    return %arg0, %c0_i32 : i32, i32
  }
  func.func @transform_1(%arg0: i32, %arg1: i32) -> (i32, i32) {
    %c0_i32 = arith.constant 0 : i32
    %c0_i32_0 = arith.constant 0 : i32
    %c0_i32_1 = arith.constant 0 : i32
    return %c0_i32, %c0_i32_0 : i32, i32
  }
  func.func @transform_2(%arg0: i32, %arg1: i32) -> (i32, i32, i32) {
    %c0_i32 = arith.constant 0 : i32
    %c0_i32_0 = arith.constant 0 : i32
    %c0_i32_1 = arith.constant 0 : i32
    return %arg1, %c0_i32, %c0_i32_0 : i32, i32, i32
  }
  func.func @transform_3(%arg0: i32, %arg1: i32) -> (i32, i32) {
    %c0_i32 = arith.constant 0 : i32
    %c0_i32_0 = arith.constant 0 : i32
    return %arg1, %c0_i32 : i32, i32
  }
  func.func @transform_4(%arg0: i32, %arg1: i32) -> (i32, i32) {
    %c0_i32 = arith.constant 0 : i32
    %c0_i32_0 = arith.constant 0 : i32
    return %arg0, %c0_i32 : i32, i32
  }
}

</mosaic_0001>

<llo_original>
// kernel: tpu_custom_call.1
$region0: #{tpu_custom_call.1}
  #allocation0 [shape = 'u32[]', space=smem, size = 0x4, offset = 0x4, fixed_abs, tag = 'smem constant byte address 0x4 - core index']
  #allocation1 [shape = 'u32[72,128]{1,0:T(1,128)}', space=vmem, size = 0x9000, scoped, tag = 'internal scratch']
  #allocation2 [shape = 'f32[16,32]{1,0:T(8,128)}', space=vmem, size = 0x2000, scoped, tag = 'scratch operand']
  #allocation3 [shape = 'f32[16,32]{1,0:T(8,128)}', space=vmem, size = 0x2000, scoped, tag = 'scratch operand']
  %s0 = inlined_call_operand.vmem [shape: f32[16,32], index: 0, kind: input, shape index: {}]
  %s1 = inlined_call_operand.vmem [shape: f32[1,32], index: 1, kind: input, shape index: {}]
  %s2 = inlined_call_operand.vmem [shape: f32[1,32,128], index: 2, kind: input, shape index: {}]
  %s3 = inlined_call_operand.vmem [shape: f32[64,32], index: 3, kind: input, shape index: {}]
  %s4 = inlined_call_operand.hbm [shape: f32[16,32], index: 4, kind: output, shape index: {}]
  %s5 = sld [smem:[#allocation0]]
  $region42: #{tpu_custom_call.1} parent=0
    _
  %s7 = ssub.s32 1, %s5
  %s8 = scalar_select 0, %s7, %s5
  $region1: #{tpu_custom_call.1} parent=0
    #allocation4 [shape = 'u8[8192]{0}', space=vmem, size = 0x2000, scoped, tag = 'output window, operand 0, single buffered']
    #allocation5 [shape = 's32[1]{0}', space=sflag, size = 0x4, scoped, tag = 'scoped memory for tpu_custom_call.1']
    %9 = vsyncpa [#allocation5], 0
    // Predicated region
    $region2: #{tpu_custom_call.1} parent=1 // pred_check
      _
    $region3: #{tpu_custom_call.1} parent=1 // pred_check_branch
      %11 = sbr.rel (0) target = $region5
    $region4: #{tpu_custom_call.1} parent=1 // pred_region
      _
    $region5: #{tpu_custom_call.1} parent=1 // pred_fallthru
      _
    // Predicated region
    $region6: #{tpu_custom_call.1} parent=1 // pred_check
      _
    $region7: #{tpu_custom_call.1} parent=1 // pred_check_branch
      %13 = sbr.rel (0) target = $region9
    $region8: #{tpu_custom_call.1} parent=1 // pred_region
      _
    $region9: #{tpu_custom_call.1} parent=1 // pred_fallthru
      _
    // Predicated region
    $region10: #{tpu_custom_call.1} parent=1 // pred_check
      _
    $region11: #{tpu_custom_call.1} parent=1 // pred_check_branch
      %15 = sbr.rel (0) target = $region13
    $region12: #{tpu_custom_call.1} parent=1 // pred_region
      _
    $region13: #{tpu_custom_call.1} parent=1 // pred_fallthru
      _
    // Predicated region
    $region14: #{tpu_custom_call.1} parent=1 // pred_check
      _
    $region15: #{tpu_custom_call.1} parent=1 // pred_check_branch
      %17 = sbr.rel (0) target = $region17
    $region16: #{tpu_custom_call.1} parent=1 // pred_region
      _
    $region17: #{tpu_custom_call.1} parent=1 // pred_fallthru
      _
    %p18 = scmp.eq.s32.totalorder 0, 0
    // Predicated region
    $region18: #{tpu_custom_call.1} parent=1 // pred_check
      %p19 = pneg %p18
    $region19: #{tpu_custom_call.1} parent=1 // pred_check_branch
      %21 = sbr.rel (%p19) target = $region21
    $region20: #{tpu_custom_call.1} parent=1 // pred_region
      %v22 = vld [vmem:[%s0] sm:$0xff]
      %v23 = vld [vmem:[%s0 + $0x8] sm:$0xff]
      %v24 = vmul.f32 %v22, %v22
      %v25 = vmul.f32 %v23, %v23
      %vm26 = vcmask 261120
      %v27 = vsel %vm26, %v24, 0.0
      %28 = vadd.xlane.f32.xlu0 %v27
      %v29 = vpop.xlane.xlu0 %28
      %v30 = vsel %vm26, %v25, 0.0
      %31 = vadd.xlane.f32.xlu0 %v30
      %v32 = vpop.xlane.xlu0 %31
      %v33 = vrcp.pop 32.0
      %v34 = vmul.f32 32.0, %v33
      %v35 = vsub.f32 1.0, %v34
      %v36 = vmul.f32 %v33, %v35
      %v37 = vadd.f32 %v33, %v36
      %vm38 = vweird.f32 %v33
      %v39 = vsel %vm38, %v33, %v37
      %v40 = vmul.f32 %v29, %v39
      %v41 = vmul.f32 %v32, %v39
      %v42 = vadd.f32 %v40, 1e-06
      %v43 = vadd.f32 %v41, 1e-06
      %v44 = vrsqrt.pop %v42
      %v45 = vmul.f32 %v44, %v42
      %v46 = vmul.f32 %v45, %v44
      %v47 = vmul.f32 0.5, %v46
      %v48 = vsub.f32 1.5, %v47
      %v49 = vmul.f32 %v44, %v48
      %vm50 = vweird.f32 %v42
      %vm51 = vweird.f32 %v44
      %vm52 = vmor %vm50, %vm51
      %v53 = vsel %vm52, %v44, %v49
      %v54 = vrsqrt.pop %v43
      %v55 = vmul.f32 %v54, %v43
      %v56 = vmul.f32 %v55, %v54
      %v57 = vmul.f32 0.5, %v56
      %v58 = vsub.f32 1.5, %v57
      %v59 = vmul.f32 %v54, %v58
      %vm60 = vweird.f32 %v43
      %vm61 = vweird.f32 %v54
      %vm62 = vmor %vm60, %vm61
      %v63 = vsel %vm62, %v54, %v59
      %v64 = vmul.f32 %v22, %v53
      %v65 = vmul.f32 %v23, %v63
      %v66 = vld [vmem:[%s1] sm:$0x1]
      %v68 = vperm.slane %v66, 0
      %v70 = vmul.f32 %v68, %v64
      %v71 = vmul.f32 %v68, %v65
      %72 = vst.msk [vmem:[#allocation2] sm:$0xff] %vm26, %v70
      %73 = vst.msk [vmem:[#allocation2 + $0x8] sm:$0xff] %vm26, %v71
    $region21: #{tpu_custom_call.1} parent=1 // pred_fallthru
      _
    %v74 = vld [vmem:[#allocation2] sm:$0xff]
    %v75 = vld [vmem:[#allocation2 + $0x8] sm:$0xff]
    %v76 = vld [vmem:[%s2] sm:$0xff]
    %v77 = vld [vmem:[%s2 + $0x8] sm:$0xff]
    %v78 = vld [vmem:[%s2 + $0x10] sm:$0xff]
    %v79 = vld [vmem:[%s2 + $0x18] sm:$0xff]
    %vm80 = vcmask 261120
    %v82 = vsel %vm80, %v74, 0
    %v85 = vsel %vm80, %v75, 0
    %87 = vmatpush.msra.mxu0 0.0
    %88 = vmatpush.msra.mxu0 0.0
    %89 = vmatpush.msra.mxu0 0.0
    %90 = vmatpush.msra.mxu0 0.0
    %91 = vmatpush.msra.mxu0 0.0
    %92 = vmatpush.msra.mxu0 0.0
    %93 = vmatpush.msra.mxu0 0.0
    %94 = vmatpush.msra.mxu0 0.0
    %95 = vmatpush.msra.mxu0 0.0
    %96 = vmatpush.msra.mxu0 0.0
    %97 = vmatpush.msra.mxu0 0.0
    %98 = vmatpush.msra.mxu0 0.0
    %99 = vmatpush.msra.mxu0 %v79
    %100 = vmatpush.msra.mxu0 %v78
    %101 = vmatpush.msra.mxu0 %v77
    %102 = vmatpush.msra.mxu0 %v76
    %103 = vmatmul.f32.gmra.mxu0 %v82
    %v104 = vpop.f32.mrf.mxu0
    %v105 = vadd.f32 0.0, %v104
    %106 = vmatmul.f32.gmra.mxu0 %v85
    %v107 = vpop.f32.mrf.mxu0
    %v108 = vadd.f32 0.0, %v107
    %109 = vdwg.mxu0
    %v110 = vxor.u32 %v105, 2147483648
    %v111 = vxor.u32 %v108, 2147483648
    %v112 = vmul.f32 %v110, 1.442695
    %v113 = vpow.pop %v112
    %v114 = vmul.f32 %v111, 1.442695
    %v115 = vpow.pop %v114
    %v116 = vadd.f32 %v113, 1.0
    %v117 = vadd.f32 %v115, 1.0
    %v118 = vrcp.pop %v116
    %v119 = vmul.f32 %v116, %v118
    %v120 = vsub.f32 1.0, %v119
    %v121 = vmul.f32 %v118, %v120
    %v122 = vadd.f32 %v118, %v121
    %vm123 = vweird.f32 %v116
    %vm124 = vweird.f32 %v118
    %vm125 = vmor %vm123, %vm124
    %v126 = vsel %vm125, %v118, %v122
    %v127 = vand.u32 2147483647, %v116
    %vm128 = vcmp.eq.f32.partialorder %v127, 8.507059e+37
    %v129 = vand.u32 %v116, 2147483648
    %v130 = vor.u32 1.1754944e-38, %v129
    %v131 = vsel %vm128, %v130, %v126
    %v132 = vmul.f32 1.0, %v131
    %v133 = vrcp.pop %v117
    %v134 = vmul.f32 %v117, %v133
    %v135 = vsub.f32 1.0, %v134
    %v136 = vmul.f32 %v133, %v135
    %v137 = vadd.f32 %v133, %v136
    %vm138 = vweird.f32 %v117
    %vm139 = vweird.f32 %v133
    %vm140 = vmor %vm138, %vm139
    %v141 = vsel %vm140, %v133, %v137
    %v142 = vand.u32 2147483647, %v117
    %vm143 = vcmp.eq.f32.partialorder %v142, 8.507059e+37
    %v144 = vand.u32 %v117, 2147483648
    %v145 = vor.u32 1.1754944e-38, %v144
    %v146 = vsel %vm143, %v145, %v141
    %v147 = vmul.f32 1.0, %v146
    %v148 = vmul.f32 %v105, %v132
    %v149 = vmul.f32 %v108, %v147
    %152 = vrot.lane.b32.xlu0 %v105, 64
    %v153 = vpop.permute.xlu0 %152
    %154 = vrot.lane.b32.xlu0 %v108, 64
    %v155 = vpop.permute.xlu0 %154
    %v158 = vmul.f32 %v148, %v153
    %v159 = vmul.f32 %v149, %v155
    %v160 = vld [vmem:[%s3] sm:$0xff]
    %v161 = vld [vmem:[%s3 + $0x8] sm:$0xff]
    %v162 = vld [vmem:[%s3 + $0x10] sm:$0xff]
    %v163 = vld [vmem:[%s3 + $0x18] sm:$0xff]
    %v164 = vld [vmem:[%s3 + $0x20] sm:$0xff]
    %v165 = vld [vmem:[%s3 + $0x28] sm:$0xff]
    %v166 = vld [vmem:[%s3 + $0x30] sm:$0xff]
    %v167 = vld [vmem:[%s3 + $0x38] sm:$0xff]
    %vm168 = vcmask 523264
    %v170 = vsel %vm168, %v158, 0
    %v173 = vsel %vm168, %v159, 0
    %175 = vmatpush.msra.mxu0 0.0
    %176 = vmatpush.msra.mxu0 0.0
    %177 = vmatpush.msra.mxu0 0.0
    %178 = vmatpush.msra.mxu0 0.0
    %179 = vmatpush.msra.mxu0 0.0
    %180 = vmatpush.msra.mxu0 0.0
    %181 = vmatpush.msra.mxu0 0.0
    %182 = vmatpush.msra.mxu0 0.0
    %183 = vmatpush.msra.mxu0 %v167
    %184 = vmatpush.msra.mxu0 %v166
    %185 = vmatpush.msra.mxu0 %v165
    %186 = vmatpush.msra.mxu0 %v164
    %187 = vmatpush.msra.mxu0 %v163
    %188 = vmatpush.msra.mxu0 %v162
    %189 = vmatpush.msra.mxu0 %v161
    %190 = vmatpush.msra.mxu0 %v160
    %191 = vmatmul.f32.gmra.mxu0 %v170
    %v192 = vpop.f32.mrf.mxu0
    %v193 = vadd.f32 0.0, %v192
    %194 = vmatmul.f32.gmra.mxu0 %v173
    %v195 = vpop.f32.mrf.mxu0
    %v196 = vadd.f32 0.0, %v195
    %197 = vdwg.mxu0
    // Predicated region
    $region22: #{tpu_custom_call.1} parent=1 // pred_check
      %p198 = pneg %p18
    $region23: #{tpu_custom_call.1} parent=1 // pred_check_branch
      %200 = sbr.rel (%p198) target = $region25
    $region24: #{tpu_custom_call.1} parent=1 // pred_region
      %201 = vst.msk [vmem:[#allocation3] sm:$0xff] %vm80, %v193
      %202 = vst.msk [vmem:[#allocation3 + $0x8] sm:$0xff] %vm80, %v196
    $region25: #{tpu_custom_call.1} parent=1 // pred_fallthru
      _
    %p203 = scmp.ne.s32.totalorder 0, 0
    // Predicated region
    $region26: #{tpu_custom_call.1} parent=1 // pred_check
      %p204 = pneg %p203
    $region27: #{tpu_custom_call.1} parent=1 // pred_check_branch
      %206 = sbr.rel (%p204) target = $region29
    $region28: #{tpu_custom_call.1} parent=1 // pred_region
      %v207 = vld [vmem:[#allocation3] sm:$0xff]
      %v208 = vld [vmem:[#allocation3 + $0x8] sm:$0xff]
      %v209 = vadd.f32 %v207, %v193
      %v210 = vadd.f32 %v208, %v196
      %211 = vst.msk [vmem:[#allocation3] sm:$0xff] %vm80, %v209
      %212 = vst.msk [vmem:[#allocation3 + $0x8] sm:$0xff] %vm80, %v210
    $region29: #{tpu_custom_call.1} parent=1 // pred_fallthru
      _
    // Predicated region
    $region30: #{tpu_custom_call.1} parent=1 // pred_check
      %p213 = pneg %p18
    $region31: #{tpu_custom_call.1} parent=1 // pred_check_branch
      %215 = sbr.rel (%p213) target = $region33
    $region32: #{tpu_custom_call.1} parent=1 // pred_region
      %v216 = vld [vmem:[#allocation3] sm:$0xff]
      %v217 = vld [vmem:[#allocation3 + $0x8] sm:$0xff]
      %218 = vst.msk [vmem:[#allocation4] sm:$0xff] %vm80, %v216
      %219 = vst.msk [vmem:[#allocation4 + $0x8] sm:$0xff] %vm80, %v217
    $region33: #{tpu_custom_call.1} parent=1 // pred_fallthru
      _
    // Predicated region
    $region34: #{tpu_custom_call.1} parent=1 // pred_check
      _
    $region35: #{tpu_custom_call.1} parent=1 // pred_check_branch
      %221 = sbr.rel (0) target = $region37
    $region36: #{tpu_custom_call.1} parent=1 // pred_region
      %223 = vsyncadd [#allocation5], 0
      %s224 = sshll.u32 [#allocation4], 4
      %s225 = int_to_ptr.vmem [resolvable:$true] %s224
      %s226 = sshll.u32 %s4, 4
      %s227 = int_to_ptr.hbm [resolvable:$true] %s226
      %232 = dma.vmem_to_hbm [thread:$0]  %s225, 256, %s227, [#allocation5], 128, 128, 8
    $region37: #{tpu_custom_call.1} parent=1 // pred_fallthru
      _
    // Predicated region
    $region38: #{tpu_custom_call.1} parent=1 // pred_check
      _
    $region39: #{tpu_custom_call.1} parent=1 // pred_check_branch
      %234 = sbr.rel (0) target = $region41
    $region40: #{tpu_custom_call.1} parent=1 // pred_region
      %236 = dma.done [#allocation5], 256
    $region41: #{tpu_custom_call.1} parent=1 // pred_fallthru
      _
    %237 = vsyncpa [#allocation5], 1

</llo_original>
